<compile_context>
chip_gen: v7x
topology: tpu7x:2x2x1
jax: 0.10.0
libtpu: 0.0.40
codegen_flags: <defaults>
</compile_context>

<pallas_src>
import functools

import jax
import jax.numpy as jnp
from jax.experimental import pallas as pl
from jax.experimental.pallas import tpu as pltpu


# ----------------------------------------------------------------------------- utils
def _choose_tile(seq_len: int, feat_dim: int,
                 target_bytes: int = 4 * 1024 * 1024,
                 max_rows: int = 512) -> int:
    """Largest TS <= max_rows that divides seq_len, is a multiple of 8, and keeps
    TS * feat_dim * 4 bytes <= target_bytes.  Falls back to full S for tiny/ragged S."""
    if seq_len % 8 != 0:
        return seq_len  # full-extent escape hatch (block == full dim)
    cap = max(8, min(max_rows, target_bytes // max(1, feat_dim * 4)))
    ts = 8
    for cand in range(8, min(seq_len, cap) + 1, 8):
        if seq_len % cand == 0:
            ts = cand
    return ts


# ----------------------------------------------------------------- phase 1: gate pass
def _ia3_gate_kernel(x_ref, w_ref, b_ref, gate_ref, acc_ref, *, inv_s):
    """Accumulate sum(sigmoid(x . w + b)) over S tiles; emit mean at the last tile.

    x_ref    : (TS, Hin)   layer_input tile
    w_ref    : (1, Hin)    gate weight row (heads == 1)
    b_ref    : (1, 1)      gate bias
    gate_ref : (1, 1)      per-batch mean gate (output, resident across S axis)
    acc_ref  : (1, 1) f32  VMEM accumulator scratch
    """
    s_idx = pl.program_id(1)

    @pl.when(s_idx == 0)
    def _init():
        acc_ref[...] = jnp.zeros_like(acc_ref)

    x = x_ref[...].astype(jnp.float32)                       # (TS, Hin)
    w = w_ref[...].astype(jnp.float32)                       # (1, Hin)
    # heads == 1 GEMV on VPU (multiply) + XLU (lane reduce); no MXU involvement.
    logits = jnp.sum(x * w, axis=-1, keepdims=True) + b_ref[...]   # (TS, 1)
    g = jax.nn.sigmoid(logits)                                     # (TS, 1)
    acc_ref[...] += jnp.sum(g, axis=0, keepdims=True)              # (1, 1)

    @pl.when(s_idx == pl.num_programs(1) - 1)
    def _finish():
        gate_ref[...] = (acc_ref[...] * inv_s).astype(gate_ref.dtype)


# ------------------------------------------------------------ phase 2: elementwise pass
def _ia3_scale_kernel(h_ref, lb_ref, gate_ref, out_ref):
    """out = hidden * (lora_B * gate): the two scale factors are pre-fused into one
    (1, H) vector so the (TS, H) tile sees a single full-tile VPU multiply."""
    combined = lb_ref[...] * gate_ref[...]            # (1, H) * (1, 1) -> (1, H)
    out_ref[...] = (h_ref[...] * combined).astype(out_ref.dtype)


# ----------------------------------------------------------------------------- wrapper
def ia3_forward(hidden_states, layer_input, lora_B, gate_w, gate_b):
    """Pallas IA3 forward with use_gating=True.

    hidden_states: (B, S, H) or None
    layer_input:   (B, S, Hin)
    lora_B:        (H,)
    gate_w:        (Hin, heads)   (transposed nn.Linear weight)
    gate_b:        (heads,)
    returns (hidden_out, gate (B, heads, 1))
    """
    B, S, Hin = layer_input.shape
    heads = gate_w.shape[1]
    if heads != 1:
        # TODO(synk): multi-head gating (reshape hidden into heads) is not implemented;
        # the PyTorch broadcast itself is only well-defined for heads == 1.
        raise NotImplementedError("ia3_forward only supports gating_heads == 1")
    H = lora_B.shape[0]

    w_row = gate_w.reshape(1, Hin).astype(jnp.float32)      # (1, Hin)
    b_2d = gate_b.reshape(1, heads).astype(jnp.float32)     # (1, 1)

    # ---------------- phase 1: per-batch mean gate -----------------------------------
    ts_x = _choose_tile(S, Hin)
    gate3 = pl.pallas_call(
        functools.partial(_ia3_gate_kernel, inv_s=1.0 / S),
        out_shape=jax.ShapeDtypeStruct((B, 1, heads), jnp.float32),
        grid_spec=pltpu.PrefetchScalarGridSpec(
            num_scalar_prefetch=0,
            grid=(B, S // ts_x),
            in_specs=[
                pl.BlockSpec((pl.Squeezed(), ts_x, Hin), lambda b, s: (b, s, 0)),
                pl.BlockSpec((1, Hin), lambda b, s: (0, 0)),
                pl.BlockSpec((1, heads), lambda b, s: (0, 0)),
            ],
            out_specs=pl.BlockSpec((pl.Squeezed(), 1, heads), lambda b, s: (b, 0, 0)),
            scratch_shapes=[pltpu.VMEM((1, heads), jnp.float32)],
        ),
        compiler_params=pltpu.CompilerParams(
            dimension_semantics=("parallel", "arbitrary"),
            vmem_limit_bytes=32 * 1024 * 1024,
        ),
        cost_estimate=pl.CostEstimate(
            flops=2 * B * S * Hin * heads,
            transcendentals=B * S * heads,
            bytes_accessed=4 * (B * S * Hin + Hin + heads + B * heads),
        ),
    )(layer_input, w_row, b_2d)

    gate = gate3.reshape(B, heads, 1)

    if hidden_states is None:
        # hidden_states is None -> output is scaling_vector * gate, shape (B, 1, H).
        # Tiny op; plain XLA is the right tool here.
        hs = jnp.broadcast_to(lora_B.reshape(1, 1, H), (B, 1, H)) * gate
        return hs, gate

    # ---------------- phase 2: hidden * (lora_B * gate), tiled over S ----------------
    ts_h = _choose_tile(S, H)
    lora_B_2d = lora_B.reshape(1, H)

    hidden_out = pl.pallas_call(
        _ia3_scale_kernel,
        out_shape=jax.ShapeDtypeStruct((B, S, H), hidden_states.dtype),
        grid_spec=pltpu.PrefetchScalarGridSpec(
            num_scalar_prefetch=0,
            grid=(B, S // ts_h),
            in_specs=[
                pl.BlockSpec((pl.Squeezed(), ts_h, H), lambda b, s: (b, s, 0)),
                pl.BlockSpec((1, H), lambda b, s: (0, 0)),
                pl.BlockSpec((pl.Squeezed(), 1, heads), lambda b, s: (b, 0, 0)),
            ],
            out_specs=pl.BlockSpec((pl.Squeezed(), ts_h, H), lambda b, s: (b, s, 0)),
        ),
        compiler_params=pltpu.CompilerParams(
            dimension_semantics=("parallel", "parallel"),
            vmem_limit_bytes=32 * 1024 * 1024,
        ),
        cost_estimate=pl.CostEstimate(
            flops=2 * B * S * H,
            transcendentals=0,
            bytes_accessed=4 * (2 * B * S * H + H + B * heads),
        ),
    )(hidden_states, lora_B_2d, gate3)

    return hidden_out, gate


# --------------------------------------------------------------------------- reference
def ia3_reference(hidden_states, layer_input, lora_B, gate_w, gate_b):
    """Pure-JAX reference mirroring the PyTorch module semantics."""
    B = layer_input.shape[0]
    scaling_vector = jnp.tile(lora_B.reshape(1, 1, -1), (B, 1, 1))   # (B,1,H)
    hs = hidden_states * scaling_vector
    gate = jax.nn.sigmoid(layer_input @ gate_w + gate_b)             # (B,S,heads)
    gate = jnp.mean(gate, axis=1)[..., None]                         # (B,heads,1)
    hs = hs * gate
    return hs, gate


if __name__ == "__main__":
    # Shapes consistent with the module (gating_heads=1), large enough to exercise
    # real S-tiling (4 sequence tiles of 512 rows) while staying small/fast.
    B, S, H, Hin, heads = 2, 2048, 256, 128, 1

    key = jax.random.PRNGKey(0)
    k1, k2, k3, k4 = jax.random.split(key, 4)

    hidden_states = jax.random.normal(k1, (B, S, H), dtype=jnp.float32)
    layer_input = jax.random.normal(k2, (B, S, Hin), dtype=jnp.float32)

    # init_weights='bert' path: normal std=0.02 for lora_B and gate weight, zero bias.
    lora_B = 0.02 * jax.random.normal(k3, (H,), dtype=jnp.float32)
    gate_w = 0.02 * jax.random.normal(k4, (Hin, heads), dtype=jnp.float32)
    gate_b = jnp.zeros((heads,), dtype=jnp.float32)

    out, gate = ia3_forward(hidden_states, layer_input, lora_B, gate_w, gate_b)
    jax.block_until_ready((out, gate))

    ref_out, ref_gate = ia3_reference(hidden_states, layer_input, lora_B, gate_w, gate_b)

    assert out.shape == (B, S, H)
    assert gate.shape == (B, heads, 1)
    assert jnp.allclose(gate, ref_gate, atol=1e-5, rtol=1e-5)
    assert jnp.allclose(out, ref_out, atol=1e-5, rtol=1e-5)

    print("KERNEL_OK")
</pallas_src>

<mosaic_0001>
module attributes {stable_mosaic.version = 11 : i64} {
  func.func @_ia3_gate_kernel(%arg0: i32, %arg1: i32, %arg2: memref<1x512x128xf32, #tpu.memory_space<vmem>>, %arg3: memref<1x128xf32, #tpu.memory_space<vmem>>, %arg4: memref<1x1xf32, #tpu.memory_space<vmem>>, %arg5: memref<1x1x1xf32, #tpu.memory_space<vmem>>, %arg6: memref<1x1xf32, #tpu.memory_space<vmem>>) attributes {dimension_semantics = [#tpu.dimension_semantics<parallel>, #tpu.dimension_semantics<arbitrary>], iteration_bounds = array<i64: 2, 4>, scalar_prefetch = 0 : i64, scratch_operands = 1 : i64, tpu.core_type = #tpu.core_type<tc>, window_params = [{transform_indices = @transform_0, window_bounds = array<i64: 1, 512, 128>}, {pipeline_mode = #tpu.pipeline_mode<synchronous>, transform_indices = @transform_1, window_bounds = array<i64: 1, 128>}, {pipeline_mode = #tpu.pipeline_mode<synchronous>, transform_indices = @transform_2, window_bounds = array<i64: 1, 1>}, {transform_indices = @transform_3, window_bounds = array<i64: 1, 1, 1>}]} {
    %c0_i32 = arith.constant 0 : i32
    %0 = arith.cmpi eq, %arg1, %c0_i32 : i32
    %1 = arith.extui %0 : i1 to i32
    %c0_i32_0 = arith.constant 0 : i32
    %2 = arith.cmpi ne, %1, %c0_i32_0 : i32
    scf.if %2 {
      %cst_14 = arith.constant 0.000000e+00 : f32
      %26 = vector.broadcast %cst_14 : f32 to vector<1x1xf32>
      %c0_15 = arith.constant 0 : index
      %c0_16 = arith.constant 0 : index
      %27 = vector.load %arg6[%c0_15, %c0_16] : memref<1x1xf32, #tpu.memory_space<vmem>>, vector<1x1xf32>
      tpu.vector_store %arg6[%c0_15, %c0_16], %26 {strides = array<i32>} : memref<1x1xf32, #tpu.memory_space<vmem>>, vector<1x1xf32>,
    } else {
    }
    %c0 = arith.constant 0 : index
    %c0_1 = arith.constant 0 : index
    %c0_2 = arith.constant 0 : index
    %3 = vector.load %arg2[%c0, %c0_1, %c0_2] : memref<1x512x128xf32, #tpu.memory_space<vmem>>, vector<1x512x128xf32>
    %4 = vector.shape_cast %3 : vector<1x512x128xf32> to vector<512x128xf32>
    %c0_3 = arith.constant 0 : index
    %c0_4 = arith.constant 0 : index
    %5 = vector.load %arg3[%c0_3, %c0_4] : memref<1x128xf32, #tpu.memory_space<vmem>>, vector<1x128xf32>
    %6 = vector.broadcast %5 : vector<1x128xf32> to vector<512x128xf32>
    %7 = arith.mulf %4, %6 : vector<512x128xf32>
    %cst = arith.constant dense<0.000000e+00> : vector<512xf32>
    %8 = vector.multi_reduction <add>, %7, %cst [1] : vector<512x128xf32> to vector<512xf32>
    %9 = vector.shape_cast %8 : vector<512xf32> to vector<512x1xf32>
    %c0_5 = arith.constant 0 : index
    %c0_6 = arith.constant 0 : index
    %10 = vector.load %arg4[%c0_5, %c0_6] : memref<1x1xf32, #tpu.memory_space<vmem>>, vector<1x1xf32>
    %11 = vector.broadcast %10 : vector<1x1xf32> to vector<512x1xf32>
    %12 = arith.addf %9, %11 : vector<512x1xf32>
    %13 = arith.negf %12 : vector<512x1xf32>
    %14 = math.exp %13 : vector<512x1xf32>
    %cst_7 = arith.constant 1.000000e+00 : f32
    %15 = vector.broadcast %cst_7 : f32 to vector<512x1xf32>
    %16 = arith.addf %15, %14 : vector<512x1xf32>
    %17 = arith.divf %15, %16 : vector<512x1xf32>
    %c0_8 = arith.constant 0 : index
    %c0_9 = arith.constant 0 : index
    %18 = vector.load %arg6[%c0_8, %c0_9] : memref<1x1xf32, #tpu.memory_space<vmem>>, vector<1x1xf32>
    %cst_10 = arith.constant dense<0.000000e+00> : vector<1xf32>
    %19 = vector.multi_reduction <add>, %17, %cst_10 [0] : vector<512x1xf32> to vector<1xf32>
    %20 = vector.shape_cast %19 : vector<1xf32> to vector<1x1xf32>
    %21 = arith.addf %18, %20 : vector<1x1xf32>
    %c0_11 = arith.constant 0 : index
    %c0_12 = arith.constant 0 : index
    %22 = vector.load %arg6[%c0_11, %c0_12] : memref<1x1xf32, #tpu.memory_space<vmem>>, vector<1x1xf32>
    tpu.vector_store %arg6[%c0_11, %c0_12], %21 {strides = array<i32>} : memref<1x1xf32, #tpu.memory_space<vmem>>, vector<1x1xf32>,
    %c3_i32 = arith.constant 3 : i32
    %23 = arith.cmpi eq, %arg1, %c3_i32 : i32
    %24 = arith.extui %23 : i1 to i32
    %c0_i32_13 = arith.constant 0 : i32
    %25 = arith.cmpi ne, %24, %c0_i32_13 : i32
    scf.if %25 {
      %c0_14 = arith.constant 0 : index
      %c0_15 = arith.constant 0 : index
      %26 = vector.load %arg6[%c0_14, %c0_15] : memref<1x1xf32, #tpu.memory_space<vmem>>, vector<1x1xf32>
      %cst_16 = arith.constant 4.8828125E-4 : f32
      %27 = vector.broadcast %cst_16 : f32 to vector<1x1xf32>
      %28 = arith.mulf %26, %27 : vector<1x1xf32>
      %c0_17 = arith.constant 0 : index
      %c0_18 = arith.constant 0 : index
      %c0_19 = arith.constant 0 : index
      %29 = vector.load %arg5[%c0_17, %c0_18, %c0_19] : memref<1x1x1xf32, #tpu.memory_space<vmem>>, vector<1x1x1xf32>
      %30 = vector.shape_cast %29 : vector<1x1x1xf32> to vector<1x1xf32>
      %31 = vector.shape_cast %28 : vector<1x1xf32> to vector<1x1x1xf32>
      tpu.vector_store %arg5[%c0_17, %c0_18, %c0_19], %31 {strides = array<i32>} : memref<1x1x1xf32, #tpu.memory_space<vmem>>, vector<1x1x1xf32>,
    } else {
    }
    return
  }
  func.func @transform_0(%arg0: i32, %arg1: i32) -> (i32, i32, i32) {
    %c0_i32 = arith.constant 0 : i32
    %c0_i32_0 = arith.constant 0 : i32
    return %arg0, %arg1, %c0_i32 : i32, i32, i32
  }
  func.func @transform_1(%arg0: i32, %arg1: i32) -> (i32, i32) {
    %c0_i32 = arith.constant 0 : i32
    %c0_i32_0 = arith.constant 0 : i32
    %c0_i32_1 = arith.constant 0 : i32
    return %c0_i32, %c0_i32_0 : i32, i32
  }
  func.func @transform_2(%arg0: i32, %arg1: i32) -> (i32, i32) {
    %c0_i32 = arith.constant 0 : i32
    %c0_i32_0 = arith.constant 0 : i32
    %c0_i32_1 = arith.constant 0 : i32
    return %c0_i32, %c0_i32_0 : i32, i32
  }
  func.func @transform_3(%arg0: i32, %arg1: i32) -> (i32, i32, i32) {
    %c0_i32 = arith.constant 0 : i32
    %c0_i32_0 = arith.constant 0 : i32
    %c0_i32_1 = arith.constant 0 : i32
    return %arg0, %c0_i32, %c0_i32_0 : i32, i32, i32
  }
}

</mosaic_0001>

<llo_original>
// kernel: tpu_custom_call.1
$region0: #{tpu_custom_call.1}
  #allocation0 [shape = 'u32[]', space=smem, size = 0x4, offset = 0x4, fixed_abs, tag = 'smem constant byte address 0x4 - core index']
  #allocation1 [shape = 'u32[144,128]{1,0:T(1,128)}', space=vmem, size = 0x12000, scoped, tag = 'internal scratch']
  #allocation2 [shape = 'f32[1,1]{1,0:T(1,128)}', space=vmem, size = 0x200, scoped, tag = 'scratch operand']
  #allocation3 [shape = 'f32[1,1]{1,0:T(1,128)S(1)}', space=vmem, size = 0x200, scoped, tag = 'scoped memory for tpu_custom_call.1']
  %s0 = inlined_call_operand.hbm [shape: f32[2,2048,128], index: 0, kind: input, shape index: {}]
  %s1 = inlined_call_operand.hbm [shape: f32[1,128], index: 1, kind: input, shape index: {}]
  %s2 = inlined_call_operand.<no memory space> [shape: f32[1,1], index: 2, kind: input, shape index: {}]
  %s3 = inlined_call_operand.vmem [shape: f32[2,1,1], index: 3, kind: output, shape index: {}]
  %s4 = sld [smem:[#allocation0]]
  $region61: #{tpu_custom_call.1} parent=0
    _
  %s6 = ssub.s32 1, %s4
  %s7 = scalar_select 0, %s6, %s4
  %v8 = vstv %s2
  %9 = vst [vmem:[#allocation3] sm:$0x1] %v8
  $region1: #{tpu_custom_call.1} parent=0
    #allocation4 [shape = 'u8[524288]{0}', space=vmem, size = 0x80000, scoped, tag = 'input window, operand 0']
    #allocation5 [shape = 's32[2]{0}', space=sflag, size = 0x8, scoped, tag = 'scoped memory for tpu_custom_call.1']
    #allocation6 [shape = 'u8[512]{0}', space=vmem, size = 0x400, scoped, tag = 'input window, operand 1, single buffered']
    #allocation7 [shape = 's32[1]{0}', space=sflag, size = 0x4, scoped, tag = 'scoped memory for tpu_custom_call.1']
    %10 = vsyncpa [#allocation5], 0
    %s11 = scalar_lea.sflag [#allocation5], 1
    %12 = vsyncpa %s11, 0
    %13 = vsyncpa [#allocation7], 0
    loop: start=0, step=1, limit=10
    $region2: #{tpu_custom_call.1} parent=1 // loop_pre_header
      _
    $region3: #{tpu_custom_call.1} parent=1 // loop_header
      %s15 = sphi 0, %s19
      %p16 = scmp.ge.s32.totalorder %s15, 10
      %s22 = sphi 0, %s34
      %s23 = sphi 0, %s30
      %s24 = sphi 0, %s22
      %s25 = sphi 0, %s23
      %s26 = sphi 0, %s24
      %s27 = sphi 0, %s25
      %s39 = sphi 0, %s41
      %s42 = sphi 0, %s39
      %s43 = sphi 0, %s42
      %s59 = sphi 0, %s43
      %s63 = sphi 0, %s63
      %s65 = sphi 0, %s63
      %s66 = sphi 0, %s65
      %s80 = sphi 0, %s66
      %s84 = sphi 0, %s84
      %s86 = sphi 0, %s84
      %s87 = sphi 0, %s86
      %s101 = sphi 0, %s87
      %s107 = sphi 0, %s109
      %s110 = sphi 0, %s107
      %s111 = sphi 0, %s110
      %s127 = sphi 0, %s111
    $region4: #{tpu_custom_call.1} parent=1 // loop_header_branch
      %18 = sbr.rel (%p16) target = $region8
    $region5: #{tpu_custom_call.1} parent=1 // loop_body
      %s20 = ssub.s32 %s15, 1
      %s21 = ssub.s32 %s15, 2
      %s28 = sadd.s32 1, %s23
      %p29 = scmp.ge.s32.totalorder %s28, 4
      %s30 = scalar_select %p29, 0, %s28
      %s31 = sadd.s32 1, %s22
      %s32 = scalar_select %p29, %s31, %s22
      %p33 = scmp.ge.s32.totalorder %s32, 2
      %s34 = scalar_select %p33, 0, %s32
      %s35 = ssub.s32 %s22, %s34
      %s36 = ssub.s32 %s23, %s30
      %s37 = sor.u32 %s35, %s36
      %p38 = scmp.eq.s32.totalorder %s37, 0
      %s40 = sadd.s32 %s39, 1
      %s41 = scalar_select %p38, %s39, %s40
      %p44 = pneg %p38
      %p45 = scmp.eq.s32.totalorder %s15, 7
      %p46 = por %p44, %p45
      %p47 = scmp.ne.s32.totalorder %s39, %s42
      %p48 = scmp.eq.s32.totalorder %s15, 0
      %p49 = por %p47, %p48
      %p50 = scmp.ne.s32.totalorder %s39, %s42
      %p51 = scmp.eq.s32.totalorder %s20, 7
      %p52 = por %p50, %p51
      %p53 = scmp.ne.s32.totalorder %s42, %s43
      %p54 = scmp.eq.s32.totalorder %s20, 0
      %p55 = por %p53, %p54
      %p56 = scmp.ne.s32.totalorder %s42, %s43
      %p57 = scmp.eq.s32.totalorder %s21, 7
      %p58 = por %p56, %p57
      %p60 = scmp.ne.s32.totalorder %s43, %s59
      %p61 = scmp.eq.s32.totalorder %s21, 0
      %p62 = por %p60, %p61
      %s64 = sadd.s32 %s63, 1
      %p67 = scmp.eq.s32.totalorder %s15, 7
      %p68 = scmp.ne.s32.totalorder %s63, %s65
      %p69 = scmp.eq.s32.totalorder %s15, 0
      %p70 = por %p68, %p69
      %p71 = scmp.ne.s32.totalorder %s63, %s65
      %p72 = scmp.eq.s32.totalorder %s20, 7
      %p73 = por %p71, %p72
      %p74 = scmp.ne.s32.totalorder %s65, %s66
      %p75 = scmp.eq.s32.totalorder %s20, 0
      %p76 = por %p74, %p75
      %p77 = scmp.ne.s32.totalorder %s65, %s66
      %p78 = scmp.eq.s32.totalorder %s21, 7
      %p79 = por %p77, %p78
      %p81 = scmp.ne.s32.totalorder %s66, %s80
      %p82 = scmp.eq.s32.totalorder %s21, 0
      %p83 = por %p81, %p82
      %s85 = sadd.s32 %s84, 1
      %p88 = scmp.eq.s32.totalorder %s15, 7
      %p89 = scmp.ne.s32.totalorder %s84, %s86
      %p90 = scmp.eq.s32.totalorder %s15, 0
      %p91 = por %p89, %p90
      %p92 = scmp.ne.s32.totalorder %s84, %s86
      %p93 = scmp.eq.s32.totalorder %s20, 7
      %p94 = por %p92, %p93
      %p95 = scmp.ne.s32.totalorder %s86, %s87
      %p96 = scmp.eq.s32.totalorder %s20, 0
      %p97 = por %p95, %p96
      %p98 = scmp.ne.s32.totalorder %s86, %s87
      %p99 = scmp.eq.s32.totalorder %s21, 7
      %p100 = por %p98, %p99
      %p102 = scmp.ne.s32.totalorder %s87, %s101
      %p103 = scmp.eq.s32.totalorder %s21, 0
      %p104 = por %p102, %p103
      %s105 = ssub.s32 %s22, %s34
      %p106 = scmp.eq.s32.totalorder %s105, 0
      %s108 = sadd.s32 %s107, 1
      %s109 = scalar_select %p106, %s107, %s108
      %p112 = pneg %p106
      %p113 = scmp.eq.s32.totalorder %s15, 7
      %p114 = por %p112, %p113
      %p115 = scmp.ne.s32.totalorder %s107, %s110
      %p116 = scmp.eq.s32.totalorder %s15, 0
      %p117 = por %p115, %p116
      %p118 = scmp.ne.s32.totalorder %s107, %s110
      %p119 = scmp.eq.s32.totalorder %s20, 7
      %p120 = por %p118, %p119
      %p121 = scmp.ne.s32.totalorder %s110, %s111
      %p122 = scmp.eq.s32.totalorder %s20, 0
      %p123 = por %p121, %p122
      %p124 = scmp.ne.s32.totalorder %s110, %s111
      %p125 = scmp.eq.s32.totalorder %s21, 7
      %p126 = por %p124, %p125
      %p128 = scmp.ne.s32.totalorder %s111, %s127
      %p129 = scmp.eq.s32.totalorder %s21, 0
      %p130 = por %p128, %p129
      %p131 = scmp.le.s32.totalorder 1, %s15
      %p132 = scmp.lt.s32.totalorder %s15, 9
      %p133 = pnand %p131, %p132
      %p134 = pneg %p133
      // Predicated region
      $region9: #{tpu_custom_call.1} parent=5 // pred_check
        _
      $region10: #{tpu_custom_call.1} parent=5 // pred_check_branch
        %136 = sbr.rel (%p133) target = $region12
      $region11: #{tpu_custom_call.1} parent=5 // pred_region
        %s137 = ssub.s32 %s15, 1
        // Predicated region
        $region13: #{tpu_custom_call.1} parent=11 // pred_check
          %p138 = pneg %p76
        $region14: #{tpu_custom_call.1} parent=11 // pred_check_branch
          %140 = sbr.rel (%p138) target = $region16
        $region15: #{tpu_custom_call.1} parent=11 // pred_region
          %s142 = ssub.s32 16, 16
          %143 = vsyncadd [#allocation7], %s142
          %s145 = sshll.u32 [#allocation6], 4
          %s146 = int_to_ptr.vmem [resolvable:$true] %s145
          %148 = dma.hbm_to_vmem [thread:$0]  %s1, 16, %s146, [#allocation7]
        $region16: #{tpu_custom_call.1} parent=11 // pred_fallthru
          _
        // Predicated region
        $region17: #{tpu_custom_call.1} parent=11 // pred_check
          %p149 = pneg %p97
        $region18: #{tpu_custom_call.1} parent=11 // pred_check_branch
          %151 = sbr.rel (%p149) target = $region20
        $region19: #{tpu_custom_call.1} parent=11 // pred_region
          _
        $region20: #{tpu_custom_call.1} parent=11 // pred_fallthru
          _
      $region12: #{tpu_custom_call.1} parent=5 // pred_fallthru
        _
      %p152 = scmp.lt.s32.totalorder %s15, 8
      // Predicated region
      $region21: #{tpu_custom_call.1} parent=5 // pred_check
        %p153 = pneg %p152
      $region22: #{tpu_custom_call.1} parent=5 // pred_check_branch
        %155 = sbr.rel (%p153) target = $region24
      $region23: #{tpu_custom_call.1} parent=5 // pred_region
        // Predicated region
        $region25: #{tpu_custom_call.1} parent=23 // pred_check
          %p156 = pneg %p49
        $region26: #{tpu_custom_call.1} parent=23 // pred_check_branch
          %158 = sbr.rel (%p156) target = $region28
        $region27: #{tpu_custom_call.1} parent=23 // pred_region
          %s159 = sand.u32 %s39, 1
          %s160 = scalar_lea.sflag [#allocation5], %s159
          %s161 = sand.u32 %s39, 1
          %s162 = smul.addr %s161, 512
          %s163 = scalar_lea.vmem [#allocation4], %s162
          %s164 = smul.u32 64, %s23
          %s166 = ssub.s32 8192, 8192
          %167 = vsyncadd %s160, %s166
          %s168 = smul.addr %s22, 256
          %s169 = sadd.s32 %s164, %s168
          %s170 = smul.addr %s169, 128
          %s171 = scalar_lea.hbm %s0, %s170
          %s172 = sshll.u32 %s163, 4
          %s173 = int_to_ptr.vmem [resolvable:$true] %s172
          %178 = dma.hbm_to_vmem [thread:$0]  %s171, 8192, %s173, %s160, 128, 128, 8
        $region28: #{tpu_custom_call.1} parent=23 // pred_fallthru
          _
      $region24: #{tpu_custom_call.1} parent=5 // pred_fallthru
        _
      %p179 = scmp.le.s32.totalorder 1, %s15
      %p180 = scmp.lt.s32.totalorder %s15, 9
      %p181 = pnand %p179, %p180
      %p182 = pneg %p181
      // Predicated region
      $region29: #{tpu_custom_call.1} parent=5 // pred_check
        _
      $region30: #{tpu_custom_call.1} parent=5 // pred_check_branch
        %184 = sbr.rel (%p181) target = $region32
      $region31: #{tpu_custom_call.1} parent=5 // pred_region
        %s185 = ssub.s32 %s15, 1
        %s186 = sand.u32 %s42, 1
        %s187 = scalar_lea.sflag [#allocation5], %s186
        %s188 = sand.u32 %s42, 1
        %s189 = smul.addr %s188, 512
        %s190 = scalar_lea.vmem [#allocation4], %s189
        // Predicated region
        $region33: #{tpu_custom_call.1} parent=31 // pred_check
          %p191 = pneg %p55
        $region34: #{tpu_custom_call.1} parent=31 // pred_check_branch
          %193 = sbr.rel (%p191) target = $region36
        $region35: #{tpu_custom_call.1} parent=31 // pred_region
          %194 = dma.done %s187, 8192
        $region36: #{tpu_custom_call.1} parent=31 // pred_fallthru
          _
        // Predicated region
        $region37: #{tpu_custom_call.1} parent=31 // pred_check
          %p195 = pneg %p76
        $region38: #{tpu_custom_call.1} parent=31 // pred_check_branch
          %197 = sbr.rel (%p195) target = $region40
        $region39: #{tpu_custom_call.1} parent=31 // pred_region
          %198 = dma.done [#allocation7], 16
        $region40: #{tpu_custom_call.1} parent=31 // pred_fallthru
          _
        %s199 = sand.u32 %s42, 1
        %s200 = scalar_lea.sflag [#allocation5], %s199
        %s201 = sand.u32 %s42, 1
        %s202 = smul.addr %s201, 512
        %s203 = scalar_lea.vmem [#allocation4], %s202
        %p204 = pneg %p55
        %p205 = pneg %p52
        %p206 = pneg %p76
        %p207 = pneg %p73
        %p208 = pneg %p97
        %p209 = pneg %p94
        %p210 = pneg %p123
        %p211 = pneg %p120
        %p212 = scmp.lt.s32.totalorder %s24, 1
        %s213 = scalar_select %p212, %s24, 1
        %s214 = scalar_lea.vmem %s3, %s213
        %s215 = smul.u32 64, %s25
        %p216 = scmp.lt.s32.totalorder %s24, 1
        %s217 = scalar_select %p216, %s24, 1
        %s218 = scalar_lea.vmem %s3, %s217
        %p219 = scmp.eq.s32.totalorder %s25, 0
        // Predicated region
        $region41: #{tpu_custom_call.1} parent=31 // pred_check
          %p220 = pneg %p219
        $region42: #{tpu_custom_call.1} parent=31 // pred_check_branch
          %222 = sbr.rel (%p220) target = $region44
        $region43: #{tpu_custom_call.1} parent=31 // pred_region
          %vm223 = vcmask 0
          %224 = vst.msk [vmem:[#allocation2] sm:$0x1] %vm223, 0.0
        $region44: #{tpu_custom_call.1} parent=31 // pred_fallthru
          _
        %v225 = vld [vmem:[%s190] sm:$0xff]
        %v226 = vld [vmem:[%s190 + $0x8] sm:$0xff]
        %v227 = vld [vmem:[%s190 + $0x10] sm:$0xff]
        %v228 = vld [vmem:[%s190 + $0x18] sm:$0xff]
        %v229 = vld [vmem:[%s190 + $0x20] sm:$0xff]
        %v230 = vld [vmem:[%s190 + $0x28] sm:$0xff]
        %v231 = vld [vmem:[%s190 + $0x30] sm:$0xff]
        %v232 = vld [vmem:[%s190 + $0x38] sm:$0xff]
        %v233 = vld [vmem:[%s190 + $0x40] sm:$0xff]
        %v234 = vld [vmem:[%s190 + $0x48] sm:$0xff]
        %v235 = vld [vmem:[%s190 + $0x50] sm:$0xff]
        %v236 = vld [vmem:[%s190 + $0x58] sm:$0xff]
        %v237 = vld [vmem:[%s190 + $0x60] sm:$0xff]
        %v238 = vld [vmem:[%s190 + $0x68] sm:$0xff]
        %v239 = vld [vmem:[%s190 + $0x70] sm:$0xff]
        %v240 = vld [vmem:[%s190 + $0x78] sm:$0xff]
        %v241 = vld [vmem:[%s190 + $0x80] sm:$0xff]
        %v242 = vld [vmem:[%s190 + $0x88] sm:$0xff]
        %v243 = vld [vmem:[%s190 + $0x90] sm:$0xff]
        %v244 = vld [vmem:[%s190 + $0x98] sm:$0xff]
        %v245 = vld [vmem:[%s190 + $0xa0] sm:$0xff]
        %v246 = vld [vmem:[%s190 + $0xa8] sm:$0xff]
        %v247 = vld [vmem:[%s190 + $0xb0] sm:$0xff]
        %v248 = vld [vmem:[%s190 + $0xb8] sm:$0xff]
        %v249 = vld [vmem:[%s190 + $0xc0] sm:$0xff]
        %v250 = vld [vmem:[%s190 + $0xc8] sm:$0xff]
        %v251 = vld [vmem:[%s190 + $0xd0] sm:$0xff]
        %v252 = vld [vmem:[%s190 + $0xd8] sm:$0xff]
        %v253 = vld [vmem:[%s190 + $0xe0] sm:$0xff]
        %v254 = vld [vmem:[%s190 + $0xe8] sm:$0xff]
        %v255 = vld [vmem:[%s190 + $0xf0] sm:$0xff]
        %v256 = vld [vmem:[%s190 + $0xf8] sm:$0xff]
        %v257 = vld [vmem:[%s190 + $0x100] sm:$0xff]
        %v258 = vld [vmem:[%s190 + $0x108] sm:$0xff]
        %v259 = vld [vmem:[%s190 + $0x110] sm:$0xff]
        %v260 = vld [vmem:[%s190 + $0x118] sm:$0xff]
        %v261 = vld [vmem:[%s190 + $0x120] sm:$0xff]
        %v262 = vld [vmem:[%s190 + $0x128] sm:$0xff]
        %v263 = vld [vmem:[%s190 + $0x130] sm:$0xff]
        %v264 = vld [vmem:[%s190 + $0x138] sm:$0xff]
        %v265 = vld [vmem:[%s190 + $0x140] sm:$0xff]
        %v266 = vld [vmem:[%s190 + $0x148] sm:$0xff]
        %v267 = vld [vmem:[%s190 + $0x150] sm:$0xff]
        %v268 = vld [vmem:[%s190 + $0x158] sm:$0xff]
        %v269 = vld [vmem:[%s190 + $0x160] sm:$0xff]
        %v270 = vld [vmem:[%s190 + $0x168] sm:$0xff]
        %v271 = vld [vmem:[%s190 + $0x170] sm:$0xff]
        %v272 = vld [vmem:[%s190 + $0x178] sm:$0xff]
        %v273 = vld [vmem:[%s190 + $0x180] sm:$0xff]
        %v274 = vld [vmem:[%s190 + $0x188] sm:$0xff]
        %v275 = vld [vmem:[%s190 + $0x190] sm:$0xff]
        %v276 = vld [vmem:[%s190 + $0x198] sm:$0xff]
        %v277 = vld [vmem:[%s190 + $0x1a0] sm:$0xff]
        %v278 = vld [vmem:[%s190 + $0x1a8] sm:$0xff]
        %v279 = vld [vmem:[%s190 + $0x1b0] sm:$0xff]
        %v280 = vld [vmem:[%s190 + $0x1b8] sm:$0xff]
        %v281 = vld [vmem:[%s190 + $0x1c0] sm:$0xff]
        %v282 = vld [vmem:[%s190 + $0x1c8] sm:$0xff]
        %v283 = vld [vmem:[%s190 + $0x1d0] sm:$0xff]
        %v284 = vld [vmem:[%s190 + $0x1d8] sm:$0xff]
        %v285 = vld [vmem:[%s190 + $0x1e0] sm:$0xff]
        %v286 = vld [vmem:[%s190 + $0x1e8] sm:$0xff]
        %v287 = vld [vmem:[%s190 + $0x1f0] sm:$0xff]
        %v288 = vld [vmem:[%s190 + $0x1f8] sm:$0xff]
        %v289 = vld [vmem:[#allocation6] sm:$0x1]
        %v291 = vlaneseq
        %v292 = vshrl.u32 %v291, 7
        %v293 = vsub.s32 0, %v292
        %v294 = vrot.slane %v289, %v293
        %v296 = vmul.f32 %v225, %v294
        %v297 = vmul.f32 %v226, %v294
        %v298 = vmul.f32 %v227, %v294
        %v299 = vmul.f32 %v228, %v294
        %v300 = vmul.f32 %v229, %v294
        %v301 = vmul.f32 %v230, %v294
        %v302 = vmul.f32 %v231, %v294
        %v303 = vmul.f32 %v232, %v294
        %v304 = vmul.f32 %v233, %v294
        %v305 = vmul.f32 %v234, %v294
        %v306 = vmul.f32 %v235, %v294
        %v307 = vmul.f32 %v236, %v294
        %v308 = vmul.f32 %v237, %v294
        %v309 = vmul.f32 %v238, %v294
        %v310 = vmul.f32 %v239, %v294
        %v311 = vmul.f32 %v240, %v294
        %v312 = vmul.f32 %v241, %v294
        %v313 = vmul.f32 %v242, %v294
        %v314 = vmul.f32 %v243, %v294
        %v315 = vmul.f32 %v244, %v294
        %v316 = vmul.f32 %v245, %v294
        %v317 = vmul.f32 %v246, %v294
        %v318 = vmul.f32 %v247, %v294
        %v319 = vmul.f32 %v248, %v294
        %v320 = vmul.f32 %v249, %v294
        %v321 = vmul.f32 %v250, %v294
        %v322 = vmul.f32 %v251, %v294
        %v323 = vmul.f32 %v252, %v294
        %v324 = vmul.f32 %v253, %v294
        %v325 = vmul.f32 %v254, %v294
        %v326 = vmul.f32 %v255, %v294
        %v327 = vmul.f32 %v256, %v294
        %v328 = vmul.f32 %v257, %v294
        %v329 = vmul.f32 %v258, %v294
        %v330 = vmul.f32 %v259, %v294
        %v331 = vmul.f32 %v260, %v294
        %v332 = vmul.f32 %v261, %v294
        %v333 = vmul.f32 %v262, %v294
        %v334 = vmul.f32 %v263, %v294
        %v335 = vmul.f32 %v264, %v294
        %v336 = vmul.f32 %v265, %v294
        %v337 = vmul.f32 %v266, %v294
        %v338 = vmul.f32 %v267, %v294
        %v339 = vmul.f32 %v268, %v294
        %v340 = vmul.f32 %v269, %v294
        %v341 = vmul.f32 %v270, %v294
        %v342 = vmul.f32 %v271, %v294
        %v343 = vmul.f32 %v272, %v294
        %v344 = vmul.f32 %v273, %v294
        %v345 = vmul.f32 %v274, %v294
        %v346 = vmul.f32 %v275, %v294
        %v347 = vmul.f32 %v276, %v294
        %v348 = vmul.f32 %v277, %v294
        %v349 = vmul.f32 %v278, %v294
        %v350 = vmul.f32 %v279, %v294
        %v351 = vmul.f32 %v280, %v294
        %v352 = vmul.f32 %v281, %v294
        %v353 = vmul.f32 %v282, %v294
        %v354 = vmul.f32 %v283, %v294
        %v355 = vmul.f32 %v284, %v294
        %v356 = vmul.f32 %v285, %v294
        %v357 = vmul.f32 %v286, %v294
        %v358 = vmul.f32 %v287, %v294
        %v359 = vmul.f32 %v288, %v294
        %360 = vadd.xlane.f32.xlu0 %v296
        %v361 = vpop.xlane.xlu0 %360
        %362 = vadd.xlane.f32.xlu0 %v297
        %v363 = vpop.xlane.xlu0 %362
        %364 = vadd.xlane.f32.xlu0 %v298
        %v365 = vpop.xlane.xlu0 %364
        %366 = vadd.xlane.f32.xlu0 %v299
        %v367 = vpop.xlane.xlu0 %366
        %368 = vadd.xlane.f32.xlu0 %v300
        %v369 = vpop.xlane.xlu0 %368
        %370 = vadd.xlane.f32.xlu0 %v301
        %v371 = vpop.xlane.xlu0 %370
        %372 = vadd.xlane.f32.xlu0 %v302
        %v373 = vpop.xlane.xlu0 %372
        %374 = vadd.xlane.f32.xlu0 %v303
        %v375 = vpop.xlane.xlu0 %374
        %376 = vadd.xlane.f32.xlu0 %v304
        %v377 = vpop.xlane.xlu0 %376
        %378 = vadd.xlane.f32.xlu0 %v305
        %v379 = vpop.xlane.xlu0 %378
        %380 = vadd.xlane.f32.xlu0 %v306
        %v381 = vpop.xlane.xlu0 %380
        %382 = vadd.xlane.f32.xlu0 %v307
        %v383 = vpop.xlane.xlu0 %382
        %384 = vadd.xlane.f32.xlu0 %v308
        %v385 = vpop.xlane.xlu0 %384
        %386 = vadd.xlane.f32.xlu0 %v309
        %v387 = vpop.xlane.xlu0 %386
        %388 = vadd.xlane.f32.xlu0 %v310
        %v389 = vpop.xlane.xlu0 %388
        %390 = vadd.xlane.f32.xlu0 %v311
        %v391 = vpop.xlane.xlu0 %390
        %392 = vadd.xlane.f32.xlu0 %v312
        %v393 = vpop.xlane.xlu0 %392
        %394 = vadd.xlane.f32.xlu0 %v313
        %v395 = vpop.xlane.xlu0 %394
        %396 = vadd.xlane.f32.xlu0 %v314
        %v397 = vpop.xlane.xlu0 %396
        %398 = vadd.xlane.f32.xlu0 %v315
        %v399 = vpop.xlane.xlu0 %398
        %400 = vadd.xlane.f32.xlu0 %v316
        %v401 = vpop.xlane.xlu0 %400
        %402 = vadd.xlane.f32.xlu0 %v317
        %v403 = vpop.xlane.xlu0 %402
        %404 = vadd.xlane.f32.xlu0 %v318
        %v405 = vpop.xlane.xlu0 %404
        %406 = vadd.xlane.f32.xlu0 %v319
        %v407 = vpop.xlane.xlu0 %406
        %408 = vadd.xlane.f32.xlu0 %v320
        %v409 = vpop.xlane.xlu0 %408
        %410 = vadd.xlane.f32.xlu0 %v321
        %v411 = vpop.xlane.xlu0 %410
        %412 = vadd.xlane.f32.xlu0 %v322
        %v413 = vpop.xlane.xlu0 %412
        %414 = vadd.xlane.f32.xlu0 %v323
        %v415 = vpop.xlane.xlu0 %414
        %416 = vadd.xlane.f32.xlu0 %v324
        %v417 = vpop.xlane.xlu0 %416
        %418 = vadd.xlane.f32.xlu0 %v325
        %v419 = vpop.xlane.xlu0 %418
        %420 = vadd.xlane.f32.xlu0 %v326
        %v421 = vpop.xlane.xlu0 %420
        %422 = vadd.xlane.f32.xlu0 %v327
        %v423 = vpop.xlane.xlu0 %422
        %424 = vadd.xlane.f32.xlu0 %v328
        %v425 = vpop.xlane.xlu0 %424
        %426 = vadd.xlane.f32.xlu0 %v329
        %v427 = vpop.xlane.xlu0 %426
        %428 = vadd.xlane.f32.xlu0 %v330
        %v429 = vpop.xlane.xlu0 %428
        %430 = vadd.xlane.f32.xlu0 %v331
        %v431 = vpop.xlane.xlu0 %430
        %432 = vadd.xlane.f32.xlu0 %v332
        %v433 = vpop.xlane.xlu0 %432
        %434 = vadd.xlane.f32.xlu0 %v333
        %v435 = vpop.xlane.xlu0 %434
        %436 = vadd.xlane.f32.xlu0 %v334
        %v437 = vpop.xlane.xlu0 %436
        %438 = vadd.xlane.f32.xlu0 %v335
        %v439 = vpop.xlane.xlu0 %438
        %440 = vadd.xlane.f32.xlu0 %v336
        %v441 = vpop.xlane.xlu0 %440
        %442 = vadd.xlane.f32.xlu0 %v337
        %v443 = vpop.xlane.xlu0 %442
        %444 = vadd.xlane.f32.xlu0 %v338
        %v445 = vpop.xlane.xlu0 %444
        %446 = vadd.xlane.f32.xlu0 %v339
        %v447 = vpop.xlane.xlu0 %446
        %448 = vadd.xlane.f32.xlu0 %v340
        %v449 = vpop.xlane.xlu0 %448
        %450 = vadd.xlane.f32.xlu0 %v341
        %v451 = vpop.xlane.xlu0 %450
        %452 = vadd.xlane.f32.xlu0 %v342
        %v453 = vpop.xlane.xlu0 %452
        %454 = vadd.xlane.f32.xlu0 %v343
        %v455 = vpop.xlane.xlu0 %454
        %456 = vadd.xlane.f32.xlu0 %v344
        %v457 = vpop.xlane.xlu0 %456
        %458 = vadd.xlane.f32.xlu0 %v345
        %v459 = vpop.xlane.xlu0 %458
        %460 = vadd.xlane.f32.xlu0 %v346
        %v461 = vpop.xlane.xlu0 %460
        %462 = vadd.xlane.f32.xlu0 %v347
        %v463 = vpop.xlane.xlu0 %462
        %464 = vadd.xlane.f32.xlu0 %v348
        %v465 = vpop.xlane.xlu0 %464
        %466 = vadd.xlane.f32.xlu0 %v349
        %v467 = vpop.xlane.xlu0 %466
        %468 = vadd.xlane.f32.xlu0 %v350
        %v469 = vpop.xlane.xlu0 %468
        %470 = vadd.xlane.f32.xlu0 %v351
        %v471 = vpop.xlane.xlu0 %470
        %472 = vadd.xlane.f32.xlu0 %v352
        %v473 = vpop.xlane.xlu0 %472
        %474 = vadd.xlane.f32.xlu0 %v353
        %v475 = vpop.xlane.xlu0 %474
        %476 = vadd.xlane.f32.xlu0 %v354
        %v477 = vpop.xlane.xlu0 %476
        %478 = vadd.xlane.f32.xlu0 %v355
        %v479 = vpop.xlane.xlu0 %478
        %480 = vadd.xlane.f32.xlu0 %v356
        %v481 = vpop.xlane.xlu0 %480
        %482 = vadd.xlane.f32.xlu0 %v357
        %v483 = vpop.xlane.xlu0 %482
        %484 = vadd.xlane.f32.xlu0 %v358
        %v485 = vpop.xlane.xlu0 %484
        %486 = vadd.xlane.f32.xlu0 %v359
        %v487 = vpop.xlane.xlu0 %486
        %v488 = vld [vmem:[#allocation3] sm:$0x1]
        %v490 = vlaneseq
        %v491 = vshrl.u32 %v490, 7
        %v492 = vsub.s32 0, %v491
        %v493 = vrot.slane %v488, %v492
        %v495 = vadd.f32 %v361, %v493
        %v496 = vadd.f32 %v363, %v493
        %v497 = vadd.f32 %v365, %v493
        %v498 = vadd.f32 %v367, %v493
        %v499 = vadd.f32 %v369, %v493
        %v500 = vadd.f32 %v371, %v493
        %v501 = vadd.f32 %v373, %v493
        %v502 = vadd.f32 %v375, %v493
        %v503 = vadd.f32 %v377, %v493
        %v504 = vadd.f32 %v379, %v493
        %v505 = vadd.f32 %v381, %v493
        %v506 = vadd.f32 %v383, %v493
        %v507 = vadd.f32 %v385, %v493
        %v508 = vadd.f32 %v387, %v493
        %v509 = vadd.f32 %v389, %v493
        %v510 = vadd.f32 %v391, %v493
        %v511 = vadd.f32 %v393, %v493
        %v512 = vadd.f32 %v395, %v493
        %v513 = vadd.f32 %v397, %v493
        %v514 = vadd.f32 %v399, %v493
        %v515 = vadd.f32 %v401, %v493
        %v516 = vadd.f32 %v403, %v493
        %v517 = vadd.f32 %v405, %v493
        %v518 = vadd.f32 %v407, %v493
        %v519 = vadd.f32 %v409, %v493
        %v520 = vadd.f32 %v411, %v493
        %v521 = vadd.f32 %v413, %v493
        %v522 = vadd.f32 %v415, %v493
        %v523 = vadd.f32 %v417, %v493
        %v524 = vadd.f32 %v419, %v493
        %v525 = vadd.f32 %v421, %v493
        %v526 = vadd.f32 %v423, %v493
        %v527 = vadd.f32 %v425, %v493
        %v528 = vadd.f32 %v427, %v493
        %v529 = vadd.f32 %v429, %v493
        %v530 = vadd.f32 %v431, %v493
        %v531 = vadd.f32 %v433, %v493
        %v532 = vadd.f32 %v435, %v493
        %v533 = vadd.f32 %v437, %v493
        %v534 = vadd.f32 %v439, %v493
        %v535 = vadd.f32 %v441, %v493
        %v536 = vadd.f32 %v443, %v493
        %v537 = vadd.f32 %v445, %v493
        %v538 = vadd.f32 %v447, %v493
        %v539 = vadd.f32 %v449, %v493
        %v540 = vadd.f32 %v451, %v493
        %v541 = vadd.f32 %v453, %v493
        %v542 = vadd.f32 %v455, %v493
        %v543 = vadd.f32 %v457, %v493
        %v544 = vadd.f32 %v459, %v493
        %v545 = vadd.f32 %v461, %v493
        %v546 = vadd.f32 %v463, %v493
        %v547 = vadd.f32 %v465, %v493
        %v548 = vadd.f32 %v467, %v493
        %v549 = vadd.f32 %v469, %v493
        %v550 = vadd.f32 %v471, %v493
        %v551 = vadd.f32 %v473, %v493
        %v552 = vadd.f32 %v475, %v493
        %v553 = vadd.f32 %v477, %v493
        %v554 = vadd.f32 %v479, %v493
        %v555 = vadd.f32 %v481, %v493
        %v556 = vadd.f32 %v483, %v493
        %v557 = vadd.f32 %v485, %v493
        %v558 = vadd.f32 %v487, %v493
        %v559 = vxor.u32 %v495, 2147483648
        %v560 = vxor.u32 %v496, 2147483648
        %v561 = vxor.u32 %v497, 2147483648
        %v562 = vxor.u32 %v498, 2147483648
        %v563 = vxor.u32 %v499, 2147483648
        %v564 = vxor.u32 %v500, 2147483648
        %v565 = vxor.u32 %v501, 2147483648
        %v566 = vxor.u32 %v502, 2147483648
        %v567 = vxor.u32 %v503, 2147483648
        %v568 = vxor.u32 %v504, 2147483648
        %v569 = vxor.u32 %v505, 2147483648
        %v570 = vxor.u32 %v506, 2147483648
        %v571 = vxor.u32 %v507, 2147483648
        %v572 = vxor.u32 %v508, 2147483648
        %v573 = vxor.u32 %v509, 2147483648
        %v574 = vxor.u32 %v510, 2147483648
        %v575 = vxor.u32 %v511, 2147483648
        %v576 = vxor.u32 %v512, 2147483648
        %v577 = vxor.u32 %v513, 2147483648
        %v578 = vxor.u32 %v514, 2147483648
        %v579 = vxor.u32 %v515, 2147483648
        %v580 = vxor.u32 %v516, 2147483648
        %v581 = vxor.u32 %v517, 2147483648
        %v582 = vxor.u32 %v518, 2147483648
        %v583 = vxor.u32 %v519, 2147483648
        %v584 = vxor.u32 %v520, 2147483648
        %v585 = vxor.u32 %v521, 2147483648
        %v586 = vxor.u32 %v522, 2147483648
        %v587 = vxor.u32 %v523, 2147483648
        %v588 = vxor.u32 %v524, 2147483648
        %v589 = vxor.u32 %v525, 2147483648
        %v590 = vxor.u32 %v526, 2147483648
        %v591 = vxor.u32 %v527, 2147483648
        %v592 = vxor.u32 %v528, 2147483648
        %v593 = vxor.u32 %v529, 2147483648
        %v594 = vxor.u32 %v530, 2147483648
        %v595 = vxor.u32 %v531, 2147483648
        %v596 = vxor.u32 %v532, 2147483648
        %v597 = vxor.u32 %v533, 2147483648
        %v598 = vxor.u32 %v534, 2147483648
        %v599 = vxor.u32 %v535, 2147483648
        %v600 = vxor.u32 %v536, 2147483648
        %v601 = vxor.u32 %v537, 2147483648
        %v602 = vxor.u32 %v538, 2147483648
        %v603 = vxor.u32 %v539, 2147483648
        %v604 = vxor.u32 %v540, 2147483648
        %v605 = vxor.u32 %v541, 2147483648
        %v606 = vxor.u32 %v542, 2147483648
        %v607 = vxor.u32 %v543, 2147483648
        %v608 = vxor.u32 %v544, 2147483648
        %v609 = vxor.u32 %v545, 2147483648
        %v610 = vxor.u32 %v546, 2147483648
        %v611 = vxor.u32 %v547, 2147483648
        %v612 = vxor.u32 %v548, 2147483648
        %v613 = vxor.u32 %v549, 2147483648
        %v614 = vxor.u32 %v550, 2147483648
        %v615 = vxor.u32 %v551, 2147483648
        %v616 = vxor.u32 %v552, 2147483648
        %v617 = vxor.u32 %v553, 2147483648
        %v618 = vxor.u32 %v554, 2147483648
        %v619 = vxor.u32 %v555, 2147483648
        %v620 = vxor.u32 %v556, 2147483648
        %v621 = vxor.u32 %v557, 2147483648
        %v622 = vxor.u32 %v558, 2147483648
        %v623 = vmul.f32 %v559, 1.442695
        %v624 = vpow.pop %v623
        %v625 = vmul.f32 %v560, 1.442695
        %v626 = vpow.pop %v625
        %v627 = vmul.f32 %v561, 1.442695
        %v628 = vpow.pop %v627
        %v629 = vmul.f32 %v562, 1.442695
        %v630 = vpow.pop %v629
        %v631 = vmul.f32 %v563, 1.442695
        %v632 = vpow.pop %v631
        %v633 = vmul.f32 %v564, 1.442695
        %v634 = vpow.pop %v633
        %v635 = vmul.f32 %v565, 1.442695
        %v636 = vpow.pop %v635
        %v637 = vmul.f32 %v566, 1.442695
        %v638 = vpow.pop %v637
        %v639 = vmul.f32 %v567, 1.442695
        %v640 = vpow.pop %v639
        %v641 = vmul.f32 %v568, 1.442695
        %v642 = vpow.pop %v641
        %v643 = vmul.f32 %v569, 1.442695
        %v644 = vpow.pop %v643
        %v645 = vmul.f32 %v570, 1.442695
        %v646 = vpow.pop %v645
        %v647 = vmul.f32 %v571, 1.442695
        %v648 = vpow.pop %v647
        %v649 = vmul.f32 %v572, 1.442695
        %v650 = vpow.pop %v649
        %v651 = vmul.f32 %v573, 1.442695
        %v652 = vpow.pop %v651
        %v653 = vmul.f32 %v574, 1.442695
        %v654 = vpow.pop %v653
        %v655 = vmul.f32 %v575, 1.442695
        %v656 = vpow.pop %v655
        %v657 = vmul.f32 %v576, 1.442695
        %v658 = vpow.pop %v657
        %v659 = vmul.f32 %v577, 1.442695
        %v660 = vpow.pop %v659
        %v661 = vmul.f32 %v578, 1.442695
        %v662 = vpow.pop %v661
        %v663 = vmul.f32 %v579, 1.442695
        %v664 = vpow.pop %v663
        %v665 = vmul.f32 %v580, 1.442695
        %v666 = vpow.pop %v665
        %v667 = vmul.f32 %v581, 1.442695
        %v668 = vpow.pop %v667
        %v669 = vmul.f32 %v582, 1.442695
        %v670 = vpow.pop %v669
        %v671 = vmul.f32 %v583, 1.442695
        %v672 = vpow.pop %v671
        %v673 = vmul.f32 %v584, 1.442695
        %v674 = vpow.pop %v673
        %v675 = vmul.f32 %v585, 1.442695
        %v676 = vpow.pop %v675
        %v677 = vmul.f32 %v586, 1.442695
        %v678 = vpow.pop %v677
        %v679 = vmul.f32 %v587, 1.442695
        %v680 = vpow.pop %v679
        %v681 = vmul.f32 %v588, 1.442695
        %v682 = vpow.pop %v681
        %v683 = vmul.f32 %v589, 1.442695
        %v684 = vpow.pop %v683
        %v685 = vmul.f32 %v590, 1.442695
        %v686 = vpow.pop %v685
        %v687 = vmul.f32 %v591, 1.442695
        %v688 = vpow.pop %v687
        %v689 = vmul.f32 %v592, 1.442695
        %v690 = vpow.pop %v689
        %v691 = vmul.f32 %v593, 1.442695
        %v692 = vpow.pop %v691
        %v693 = vmul.f32 %v594, 1.442695
        %v694 = vpow.pop %v693
        %v695 = vmul.f32 %v595, 1.442695
        %v696 = vpow.pop %v695
        %v697 = vmul.f32 %v596, 1.442695
        %v698 = vpow.pop %v697
        %v699 = vmul.f32 %v597, 1.442695
        %v700 = vpow.pop %v699
        %v701 = vmul.f32 %v598, 1.442695
        %v702 = vpow.pop %v701
        %v703 = vmul.f32 %v599, 1.442695
        %v704 = vpow.pop %v703
        %v705 = vmul.f32 %v600, 1.442695
        %v706 = vpow.pop %v705
        %v707 = vmul.f32 %v601, 1.442695
        %v708 = vpow.pop %v707
        %v709 = vmul.f32 %v602, 1.442695
        %v710 = vpow.pop %v709
        %v711 = vmul.f32 %v603, 1.442695
        %v712 = vpow.pop %v711
        %v713 = vmul.f32 %v604, 1.442695
        %v714 = vpow.pop %v713
        %v715 = vmul.f32 %v605, 1.442695
        %v716 = vpow.pop %v715
        %v717 = vmul.f32 %v606, 1.442695
        %v718 = vpow.pop %v717
        %v719 = vmul.f32 %v607, 1.442695
        %v720 = vpow.pop %v719
        %v721 = vmul.f32 %v608, 1.442695
        %v722 = vpow.pop %v721
        %v723 = vmul.f32 %v609, 1.442695
        %v724 = vpow.pop %v723
        %v725 = vmul.f32 %v610, 1.442695
        %v726 = vpow.pop %v725
        %v727 = vmul.f32 %v611, 1.442695
        %v728 = vpow.pop %v727
        %v729 = vmul.f32 %v612, 1.442695
        %v730 = vpow.pop %v729
        %v731 = vmul.f32 %v613, 1.442695
        %v732 = vpow.pop %v731
        %v733 = vmul.f32 %v614, 1.442695
        %v734 = vpow.pop %v733
        %v735 = vmul.f32 %v615, 1.442695
        %v736 = vpow.pop %v735
        %v737 = vmul.f32 %v616, 1.442695
        %v738 = vpow.pop %v737
        %v739 = vmul.f32 %v617, 1.442695
        %v740 = vpow.pop %v739
        %v741 = vmul.f32 %v618, 1.442695
        %v742 = vpow.pop %v741
        %v743 = vmul.f32 %v619, 1.442695
        %v744 = vpow.pop %v743
        %v745 = vmul.f32 %v620, 1.442695
        %v746 = vpow.pop %v745
        %v747 = vmul.f32 %v621, 1.442695
        %v748 = vpow.pop %v747
        %v749 = vmul.f32 %v622, 1.442695
        %v750 = vpow.pop %v749
        %v751 = vadd.f32 %v624, 1.0
        %v752 = vadd.f32 %v626, 1.0
        %v753 = vadd.f32 %v628, 1.0
        %v754 = vadd.f32 %v630, 1.0
        %v755 = vadd.f32 %v632, 1.0
        %v756 = vadd.f32 %v634, 1.0
        %v757 = vadd.f32 %v636, 1.0
        %v758 = vadd.f32 %v638, 1.0
        %v759 = vadd.f32 %v640, 1.0
        %v760 = vadd.f32 %v642, 1.0
        %v761 = vadd.f32 %v644, 1.0
        %v762 = vadd.f32 %v646, 1.0
        %v763 = vadd.f32 %v648, 1.0
        %v764 = vadd.f32 %v650, 1.0
        %v765 = vadd.f32 %v652, 1.0
        %v766 = vadd.f32 %v654, 1.0
        %v767 = vadd.f32 %v656, 1.0
        %v768 = vadd.f32 %v658, 1.0
        %v769 = vadd.f32 %v660, 1.0
        %v770 = vadd.f32 %v662, 1.0
        %v771 = vadd.f32 %v664, 1.0
        %v772 = vadd.f32 %v666, 1.0
        %v773 = vadd.f32 %v668, 1.0
        %v774 = vadd.f32 %v670, 1.0
        %v775 = vadd.f32 %v672, 1.0
        %v776 = vadd.f32 %v674, 1.0
        %v777 = vadd.f32 %v676, 1.0
        %v778 = vadd.f32 %v678, 1.0
        %v779 = vadd.f32 %v680, 1.0
        %v780 = vadd.f32 %v682, 1.0
        %v781 = vadd.f32 %v684, 1.0
        %v782 = vadd.f32 %v686, 1.0
        %v783 = vadd.f32 %v688, 1.0
        %v784 = vadd.f32 %v690, 1.0
        %v785 = vadd.f32 %v692, 1.0
        %v786 = vadd.f32 %v694, 1.0
        %v787 = vadd.f32 %v696, 1.0
        %v788 = vadd.f32 %v698, 1.0
        %v789 = vadd.f32 %v700, 1.0
        %v790 = vadd.f32 %v702, 1.0
        %v791 = vadd.f32 %v704, 1.0
        %v792 = vadd.f32 %v706, 1.0
        %v793 = vadd.f32 %v708, 1.0
        %v794 = vadd.f32 %v710, 1.0
        %v795 = vadd.f32 %v712, 1.0
        %v796 = vadd.f32 %v714, 1.0
        %v797 = vadd.f32 %v716, 1.0
        %v798 = vadd.f32 %v718, 1.0
        %v799 = vadd.f32 %v720, 1.0
        %v800 = vadd.f32 %v722, 1.0
        %v801 = vadd.f32 %v724, 1.0
        %v802 = vadd.f32 %v726, 1.0
        %v803 = vadd.f32 %v728, 1.0
        %v804 = vadd.f32 %v730, 1.0
        %v805 = vadd.f32 %v732, 1.0
        %v806 = vadd.f32 %v734, 1.0
        %v807 = vadd.f32 %v736, 1.0
        %v808 = vadd.f32 %v738, 1.0
        %v809 = vadd.f32 %v740, 1.0
        %v810 = vadd.f32 %v742, 1.0
        %v811 = vadd.f32 %v744, 1.0
        %v812 = vadd.f32 %v746, 1.0
        %v813 = vadd.f32 %v748, 1.0
        %v814 = vadd.f32 %v750, 1.0
        %v815 = vrcp.pop %v751
        %v816 = vmul.f32 1.0, %v815
        %v817 = vrcp.pop %v752
        %v818 = vmul.f32 1.0, %v817
        %v819 = vrcp.pop %v753
        %v820 = vmul.f32 1.0, %v819
        %v821 = vrcp.pop %v754
        %v822 = vmul.f32 1.0, %v821
        %v823 = vrcp.pop %v755
        %v824 = vmul.f32 1.0, %v823
        %v825 = vrcp.pop %v756
        %v826 = vmul.f32 1.0, %v825
        %v827 = vrcp.pop %v757
        %v828 = vmul.f32 1.0, %v827
        %v829 = vrcp.pop %v758
        %v830 = vmul.f32 1.0, %v829
        %v831 = vrcp.pop %v759
        %v832 = vmul.f32 1.0, %v831
        %v833 = vrcp.pop %v760
        %v834 = vmul.f32 1.0, %v833
        %v835 = vrcp.pop %v761
        %v836 = vmul.f32 1.0, %v835
        %v837 = vrcp.pop %v762
        %v838 = vmul.f32 1.0, %v837
        %v839 = vrcp.pop %v763
        %v840 = vmul.f32 1.0, %v839
        %v841 = vrcp.pop %v764
        %v842 = vmul.f32 1.0, %v841
        %v843 = vrcp.pop %v765
        %v844 = vmul.f32 1.0, %v843
        %v845 = vrcp.pop %v766
        %v846 = vmul.f32 1.0, %v845
        %v847 = vrcp.pop %v767
        %v848 = vmul.f32 1.0, %v847
        %v849 = vrcp.pop %v768
        %v850 = vmul.f32 1.0, %v849
        %v851 = vrcp.pop %v769
        %v852 = vmul.f32 1.0, %v851
        %v853 = vrcp.pop %v770
        %v854 = vmul.f32 1.0, %v853
        %v855 = vrcp.pop %v771
        %v856 = vmul.f32 1.0, %v855
        %v857 = vrcp.pop %v772
        %v858 = vmul.f32 1.0, %v857
        %v859 = vrcp.pop %v773
        %v860 = vmul.f32 1.0, %v859
        %v861 = vrcp.pop %v774
        %v862 = vmul.f32 1.0, %v861
        %v863 = vrcp.pop %v775
        %v864 = vmul.f32 1.0, %v863
        %v865 = vrcp.pop %v776
        %v866 = vmul.f32 1.0, %v865
        %v867 = vrcp.pop %v777
        %v868 = vmul.f32 1.0, %v867
        %v869 = vrcp.pop %v778
        %v870 = vmul.f32 1.0, %v869
        %v871 = vrcp.pop %v779
        %v872 = vmul.f32 1.0, %v871
        %v873 = vrcp.pop %v780
        %v874 = vmul.f32 1.0, %v873
        %v875 = vrcp.pop %v781
        %v876 = vmul.f32 1.0, %v875
        %v877 = vrcp.pop %v782
        %v878 = vmul.f32 1.0, %v877
        %v879 = vrcp.pop %v783
        %v880 = vmul.f32 1.0, %v879
        %v881 = vrcp.pop %v784
        %v882 = vmul.f32 1.0, %v881
        %v883 = vrcp.pop %v785
        %v884 = vmul.f32 1.0, %v883
        %v885 = vrcp.pop %v786
        %v886 = vmul.f32 1.0, %v885
        %v887 = vrcp.pop %v787
        %v888 = vmul.f32 1.0, %v887
        %v889 = vrcp.pop %v788
        %v890 = vmul.f32 1.0, %v889
        %v891 = vrcp.pop %v789
        %v892 = vmul.f32 1.0, %v891
        %v893 = vrcp.pop %v790
        %v894 = vmul.f32 1.0, %v893
        %v895 = vrcp.pop %v791
        %v896 = vmul.f32 1.0, %v895
        %v897 = vrcp.pop %v792
        %v898 = vmul.f32 1.0, %v897
        %v899 = vrcp.pop %v793
        %v900 = vmul.f32 1.0, %v899
        %v901 = vrcp.pop %v794
        %v902 = vmul.f32 1.0, %v901
        %v903 = vrcp.pop %v795
        %v904 = vmul.f32 1.0, %v903
        %v905 = vrcp.pop %v796
        %v906 = vmul.f32 1.0, %v905
        %v907 = vrcp.pop %v797
        %v908 = vmul.f32 1.0, %v907
        %v909 = vrcp.pop %v798
        %v910 = vmul.f32 1.0, %v909
        %v911 = vrcp.pop %v799
        %v912 = vmul.f32 1.0, %v911
        %v913 = vrcp.pop %v800
        %v914 = vmul.f32 1.0, %v913
        %v915 = vrcp.pop %v801
        %v916 = vmul.f32 1.0, %v915
        %v917 = vrcp.pop %v802
        %v918 = vmul.f32 1.0, %v917
        %v919 = vrcp.pop %v803
        %v920 = vmul.f32 1.0, %v919
        %v921 = vrcp.pop %v804
        %v922 = vmul.f32 1.0, %v921
        %v923 = vrcp.pop %v805
        %v924 = vmul.f32 1.0, %v923
        %v925 = vrcp.pop %v806
        %v926 = vmul.f32 1.0, %v925
        %v927 = vrcp.pop %v807
        %v928 = vmul.f32 1.0, %v927
        %v929 = vrcp.pop %v808
        %v930 = vmul.f32 1.0, %v929
        %v931 = vrcp.pop %v809
        %v932 = vmul.f32 1.0, %v931
        %v933 = vrcp.pop %v810
        %v934 = vmul.f32 1.0, %v933
        %v935 = vrcp.pop %v811
        %v936 = vmul.f32 1.0, %v935
        %v937 = vrcp.pop %v812
        %v938 = vmul.f32 1.0, %v937
        %v939 = vrcp.pop %v813
        %v940 = vmul.f32 1.0, %v939
        %v941 = vrcp.pop %v814
        %v942 = vmul.f32 1.0, %v941
        %v943 = vld [vmem:[#allocation2] sm:$0x1]
        %vm944 = vcmask 7168
        %v945 = vsel %vm944, %v816, 0.0
        %v946 = vsel %vm944, %v818, 0.0
        %v947 = vadd.f32 %v945, %v946
        %v948 = vsel %vm944, %v820, 0.0
        %v949 = vadd.f32 %v947, %v948
        %v950 = vsel %vm944, %v822, 0.0
        %v951 = vadd.f32 %v949, %v950
        %v952 = vsel %vm944, %v824, 0.0
        %v953 = vadd.f32 %v951, %v952
        %v954 = vsel %vm944, %v826, 0.0
        %v955 = vadd.f32 %v953, %v954
        %v956 = vsel %vm944, %v828, 0.0
        %v957 = vadd.f32 %v955, %v956
        %v958 = vsel %vm944, %v830, 0.0
        %v959 = vadd.f32 %v957, %v958
        %v960 = vsel %vm944, %v832, 0.0
        %v961 = vadd.f32 %v959, %v960
        %v962 = vsel %vm944, %v834, 0.0
        %v963 = vadd.f32 %v961, %v962
        %v964 = vsel %vm944, %v836, 0.0
        %v965 = vadd.f32 %v963, %v964
        %v966 = vsel %vm944, %v838, 0.0
        %v967 = vadd.f32 %v965, %v966
        %v968 = vsel %vm944, %v840, 0.0
        %v969 = vadd.f32 %v967, %v968
        %v970 = vsel %vm944, %v842, 0.0
        %v971 = vadd.f32 %v969, %v970
        %v972 = vsel %vm944, %v844, 0.0
        %v973 = vadd.f32 %v971, %v972
        %v974 = vsel %vm944, %v846, 0.0
        %v975 = vadd.f32 %v973, %v974
        %v976 = vsel %vm944, %v848, 0.0
        %v977 = vadd.f32 %v975, %v976
        %v978 = vsel %vm944, %v850, 0.0
        %v979 = vadd.f32 %v977, %v978
        %v980 = vsel %vm944, %v852, 0.0
        %v981 = vadd.f32 %v979, %v980
        %v982 = vsel %vm944, %v854, 0.0
        %v983 = vadd.f32 %v981, %v982
        %v984 = vsel %vm944, %v856, 0.0
        %v985 = vadd.f32 %v983, %v984
        %v986 = vsel %vm944, %v858, 0.0
        %v987 = vadd.f32 %v985, %v986
        %v988 = vsel %vm944, %v860, 0.0
        %v989 = vadd.f32 %v987, %v988
        %v990 = vsel %vm944, %v862, 0.0
        %v991 = vadd.f32 %v989, %v990
        %v992 = vsel %vm944, %v864, 0.0
        %v993 = vadd.f32 %v991, %v992
        %v994 = vsel %vm944, %v866, 0.0
        %v995 = vadd.f32 %v993, %v994
        %v996 = vsel %vm944, %v868, 0.0
        %v997 = vadd.f32 %v995, %v996
        %v998 = vsel %vm944, %v870, 0.0
        %v999 = vadd.f32 %v997, %v998
        %v1000 = vsel %vm944, %v872, 0.0
        %v1001 = vadd.f32 %v999, %v1000
        %v1002 = vsel %vm944, %v874, 0.0
        %v1003 = vadd.f32 %v1001, %v1002
        %v1004 = vsel %vm944, %v876, 0.0
        %v1005 = vadd.f32 %v1003, %v1004
        %v1006 = vsel %vm944, %v878, 0.0
        %v1007 = vadd.f32 %v1005, %v1006
        %v1008 = vsel %vm944, %v880, 0.0
        %v1009 = vadd.f32 %v1007, %v1008
        %v1010 = vsel %vm944, %v882, 0.0
        %v1011 = vadd.f32 %v1009, %v1010
        %v1012 = vsel %vm944, %v884, 0.0
        %v1013 = vadd.f32 %v1011, %v1012
        %v1014 = vsel %vm944, %v886, 0.0
        %v1015 = vadd.f32 %v1013, %v1014
        %v1016 = vsel %vm944, %v888, 0.0
        %v1017 = vadd.f32 %v1015, %v1016
        %v1018 = vsel %vm944, %v890, 0.0
        %v1019 = vadd.f32 %v1017, %v1018
        %v1020 = vsel %vm944, %v892, 0.0
        %v1021 = vadd.f32 %v1019, %v1020
        %v1022 = vsel %vm944, %v894, 0.0
        %v1023 = vadd.f32 %v1021, %v1022
        %v1024 = vsel %vm944, %v896, 0.0
        %v1025 = vadd.f32 %v1023, %v1024
        %v1026 = vsel %vm944, %v898, 0.0
        %v1027 = vadd.f32 %v1025, %v1026
        %v1028 = vsel %vm944, %v900, 0.0
        %v1029 = vadd.f32 %v1027, %v1028
        %v1030 = vsel %vm944, %v902, 0.0
        %v1031 = vadd.f32 %v1029, %v1030
        %v1032 = vsel %vm944, %v904, 0.0
        %v1033 = vadd.f32 %v1031, %v1032
        %v1034 = vsel %vm944, %v906, 0.0
        %v1035 = vadd.f32 %v1033, %v1034
        %v1036 = vsel %vm944, %v908, 0.0
        %v1037 = vadd.f32 %v1035, %v1036
        %v1038 = vsel %vm944, %v910, 0.0
        %v1039 = vadd.f32 %v1037, %v1038
        %v1040 = vsel %vm944, %v912, 0.0
        %v1041 = vadd.f32 %v1039, %v1040
        %v1042 = vsel %vm944, %v914, 0.0
        %v1043 = vadd.f32 %v1041, %v1042
        %v1044 = vsel %vm944, %v916, 0.0
        %v1045 = vadd.f32 %v1043, %v1044
        %v1046 = vsel %vm944, %v918, 0.0
        %v1047 = vadd.f32 %v1045, %v1046
        %v1048 = vsel %vm944, %v920, 0.0
        %v1049 = vadd.f32 %v1047, %v1048
        %v1050 = vsel %vm944, %v922, 0.0
        %v1051 = vadd.f32 %v1049, %v1050
        %v1052 = vsel %vm944, %v924, 0.0
        %v1053 = vadd.f32 %v1051, %v1052
        %v1054 = vsel %vm944, %v926, 0.0
        %v1055 = vadd.f32 %v1053, %v1054
        %v1056 = vsel %vm944, %v928, 0.0
        %v1057 = vadd.f32 %v1055, %v1056
        %v1058 = vsel %vm944, %v930, 0.0
        %v1059 = vadd.f32 %v1057, %v1058
        %v1060 = vsel %vm944, %v932, 0.0
        %v1061 = vadd.f32 %v1059, %v1060
        %v1062 = vsel %vm944, %v934, 0.0
        %v1063 = vadd.f32 %v1061, %v1062
        %v1064 = vsel %vm944, %v936, 0.0
        %v1065 = vadd.f32 %v1063, %v1064
        %v1066 = vsel %vm944, %v938, 0.0
        %v1067 = vadd.f32 %v1065, %v1066
        %v1068 = vsel %vm944, %v940, 0.0
        %v1069 = vadd.f32 %v1067, %v1068
        %v1070 = vsel %vm944, %v942, 0.0
        %v1071 = vadd.f32 %v1069, %v1070
        %v1072 = vrot.slane %v1071, 4
        %v1073 = vadd.f32 %v1071, %v1072
        %v1074 = vrot.slane %v1073, 2
        %v1075 = vadd.f32 %v1073, %v1074
        %v1076 = vrot.slane %v1075, 1
        %v1077 = vadd.f32 %v1075, %v1076
        %v1078 = vadd.f32 %v943, %v1077
        %vm1079 = vcmask 0
        %1080 = vst.msk [vmem:[#allocation2] sm:$0x1] %vm1079, %v1078
        %p1081 = scmp.eq.s32.totalorder %s25, 3
        // Predicated region
        $region45: #{tpu_custom_call.1} parent=31 // pred_check
          %p1082 = pneg %p1081
        $region46: #{tpu_custom_call.1} parent=31 // pred_check_branch
          %1084 = sbr.rel (%p1082) target = $region48
        $region47: #{tpu_custom_call.1} parent=31 // pred_region
          %v1085 = vld [vmem:[#allocation2] sm:$0x1]
          %v1086 = vmul.f32 %v1085, 0.00048828125
          %1087 = vst.msk [vmem:[%s218] sm:$0x1] %vm1079, %v1086
        $region48: #{tpu_custom_call.1} parent=31 // pred_fallthru
          _
        %p1088 = scmp.lt.s32.totalorder %s24, 1
        %s1089 = scalar_select %p1088, %s24, 1
        %s1090 = scalar_lea.vmem %s3, %s1089
        // Predicated region
        $region49: #{tpu_custom_call.1} parent=31 // pred_check
          %p1091 = pneg %p120
        $region50: #{tpu_custom_call.1} parent=31 // pred_check_branch
          %1093 = sbr.rel (%p1091) target = $region52
        $region51: #{tpu_custom_call.1} parent=31 // pred_region
          _
        $region52: #{tpu_custom_call.1} parent=31 // pred_fallthru
          _
      $region32: #{tpu_custom_call.1} parent=5 // pred_fallthru
        _
      %p1094 = scmp.le.s32.totalorder 2, %s15
      // Predicated region
      $region53: #{tpu_custom_call.1} parent=5 // pred_check
        %p1095 = pneg %p1094
      $region54: #{tpu_custom_call.1} parent=5 // pred_check_branch
        %1097 = sbr.rel (%p1095) target = $region56
      $region55: #{tpu_custom_call.1} parent=5 // pred_region
        %s1098 = ssub.s32 %s15, 2
        // Predicated region
        $region57: #{tpu_custom_call.1} parent=55 // pred_check
          %p1099 = pneg %p126
        $region58: #{tpu_custom_call.1} parent=55 // pred_check_branch
          %1101 = sbr.rel (%p1099) target = $region60
        $region59: #{tpu_custom_call.1} parent=55 // pred_region
          %p1102 = scmp.lt.s32.totalorder %s26, 1
          %s1103 = scalar_select %p1102, %s26, 1
          %s1104 = scalar_lea.vmem %s3, %s1103
        $region60: #{tpu_custom_call.1} parent=55 // pred_fallthru
          _
      $region56: #{tpu_custom_call.1} parent=5 // pred_fallthru
        _
    $region6: #{tpu_custom_call.1} parent=1 // loop_footer
      %s19 = sadd.s32 1, %s15
    $region7: #{tpu_custom_call.1} parent=1 // loop_footer_branch
      %14 = sbr.rel target = $region3
    $region8: #{tpu_custom_call.1} parent=1 // loop_exit
      _
    %1105 = vsyncpa [#allocation5], 1
    %s1106 = scalar_lea.sflag [#allocation5], 1
    %1107 = vsyncpa %s1106, 1
    %1108 = vsyncpa [#allocation7], 1

</llo_original>
